<compile_context>
chip_gen: v7x
topology: tpu7x:2x2x1
jax: 0.10.0
libtpu: 0.0.40
codegen_flags: <defaults>
</compile_context>

<pallas_src>
import functools

import jax
import jax.numpy as jnp
from jax.experimental import pallas as pl
from jax.experimental.pallas import tpu as pltpu

EPS = 1e-5            # PyTorch BatchNorm1d default eps
DROPOUT_P = 0.2       # wrapper default
PRELU_ALPHA = 0.25    # PyTorch PReLU default (num_parameters=1)

# Fits comfortably inside every generation's scoped VMEM (raises v5e's 16 MiB
# default; v7x only has 64 MiB physical, so tiles are sized to stay well below).
_VMEM_LIMIT_BYTES = 32 * 1024 * 1024


# ---------------------------------------------------------------------------
# pass 1: encoder matmul + per-tile stats for BatchNorm #1
# ---------------------------------------------------------------------------
def _encoder_kernel(x_ref, w_ref, z0_ref, stats_ref):
    # bf16 operands on the MXU, f32 accumulation.  Encoder bias omitted: it is
    # exactly cancelled by the training-mode BN mean subtraction that follows.
    z0 = jnp.dot(x_ref[...], w_ref[...], preferred_element_type=jnp.float32)
    s = jnp.sum(z0, axis=0, keepdims=True)              # (1, H)
    ss = jnp.sum(z0 * z0, axis=0, keepdims=True)        # (1, H)
    stats_ref[...] = jnp.concatenate([s, ss], axis=0)[None]   # (1, 2, H)
    z0_ref[...] = z0.astype(z0_ref.dtype)


# ---------------------------------------------------------------------------
# pass 2: folded BN #1 + projection matmul + per-tile stats for BatchNorm #2
# ---------------------------------------------------------------------------
def _project_kernel(z0_ref, w_ref, scale1_ref, shift1_ref,
                    z_ref, h0_ref, stats_ref,
                    *, rows_total, tile_rows, needs_mask):
    # BN #1 folded to a per-feature scale/shift (one mul + one add per element).
    z = z0_ref[...].astype(jnp.float32) * scale1_ref[...] + shift1_ref[...]
    z_ref[...] = z.astype(z_ref.dtype)

    # Projection Linear (bias dropped: cancelled by BN #2); bf16 on the MXU.
    h0 = jnp.dot(z.astype(jnp.bfloat16), w_ref[...],
                 preferred_element_type=jnp.float32)

    if needs_mask:  # static: only taken when N was zero-padded to a tile multiple
        row = (jax.lax.broadcasted_iota(jnp.int32, h0.shape, 0)
               + pl.program_id(0) * tile_rows)
        h0_for_stats = jnp.where(row < rows_total, h0, 0.0)
    else:
        h0_for_stats = h0
    s = jnp.sum(h0_for_stats, axis=0, keepdims=True)
    ss = jnp.sum(h0_for_stats * h0_for_stats, axis=0, keepdims=True)
    stats_ref[...] = jnp.concatenate([s, ss], axis=0)[None]
    h0_ref[...] = h0.astype(h0_ref.dtype)


# ---------------------------------------------------------------------------
# pass 3: folded BN #2 (dropout rescale pre-folded) + PReLU + dropout mask
# ---------------------------------------------------------------------------
def _head_kernel(seed_ref, alpha_ref, h0_ref, scale2_ref, shift2_ref, p_ref,
                 *, tile_rows, hidden, keep_threshold):
    # scale2/shift2 already carry the 1/(1-p) dropout rescale (sign-preserving,
    # so the PReLU comparison below is unaffected).
    h = h0_ref[...].astype(jnp.float32) * scale2_ref[...] + shift2_ref[...]
    alpha = alpha_ref[0]
    val = jnp.where(h > 0.0, h, alpha * h)               # PReLU

    # Counter-based hash RNG: every element hashes its *global* index + seed so
    # each tile draws a distinct, reproducible mask (pure integer VPU ops).
    base = pl.program_id(0) * (tile_rows * hidden)
    row = jax.lax.broadcasted_iota(jnp.int32, h.shape, 0)
    col = jax.lax.broadcasted_iota(jnp.int32, h.shape, 1)
    k = (row * hidden + col + base).astype(jnp.uint32) + seed_ref[0].astype(jnp.uint32)
    k = (k ^ (k >> 16)) * jnp.uint32(0x85EBCA6B)
    k = (k ^ (k >> 13)) * jnp.uint32(0xC2B2AE35)
    k = k ^ (k >> 16)
    # keep iff top 24 random bits >= p * 2^24  (P(keep) = 1 - DROPOUT_P)
    keep = (k >> 8) >= jnp.uint32(keep_threshold)

    p_ref[...] = jnp.where(keep, val, 0.0).astype(p_ref.dtype)


# ---------------------------------------------------------------------------
# host-side helpers
# ---------------------------------------------------------------------------
def _fold_bn(stats, gamma, beta, n, post_scale=1.0):
    """Reduce per-tile (sum, sumsq) partials and fold BN into y = x*scale + shift.

    `post_scale` lets a positive multiplicative factor applied *after* the BN
    (e.g. the dropout 1/(1-p) rescale) be folded in for free.
    """
    total = jnp.sum(stats, axis=0)                       # (2, H)
    mean = total[0] / n
    var = jnp.maximum(total[1] / n - mean * mean, 0.0)   # biased variance (training BN)
    scale = gamma.reshape(-1) * jax.lax.rsqrt(var + EPS)
    shift = beta.reshape(-1) - mean * scale
    return ((scale * post_scale).reshape(1, -1).astype(jnp.float32),
            (shift * post_scale).reshape(1, -1).astype(jnp.float32))


def _pick_tile(n, tile_rows):
    """Largest multiple-of-16 row tile <= tile_rows (single rounded-up tile if n small)."""
    if n <= tile_rows:
        return max(16, ((n + 15) // 16) * 16)
    return max(16, (min(int(tile_rows), n) // 16) * 16)


def bgrl_forward(x, params, seed, *, tile_rows=1024):
    """Forward pass of BGRLModelWrapper. Returns (z, p), both [N, H] float32."""
    N, F = x.shape
    H = params["w_enc"].shape[1]

    tile = _pick_tile(N, tile_rows)
    nt = pl.cdiv(N, tile)
    n_pad = nt * tile
    needs_mask = n_pad != N

    # bf16 operands for the MXU (f32 accumulation happens inside the kernels).
    x_bf = x.astype(jnp.bfloat16)
    if needs_mask:
        # Zero rows are exactly neutral for pass-1 stats (no encoder bias).
        x_bf = jnp.pad(x_bf, ((0, n_pad - N), (0, 0)))
    w_enc = params["w_enc"].astype(jnp.bfloat16)
    w_proj = params["w_proj"].astype(jnp.bfloat16)

    cparams = pltpu.CompilerParams(dimension_semantics=("parallel",),
                                   vmem_limit_bytes=_VMEM_LIMIT_BYTES)

    # ---- pass 1: encoder matmul + BN1 stats --------------------------------
    z0, stats1 = pl.pallas_call(
        _encoder_kernel,
        grid=(nt,),
        in_specs=[pl.BlockSpec((tile, F), lambda i: (i, 0)),
                  pl.BlockSpec((F, H), lambda i: (0, 0))],          # resident weights
        out_specs=(pl.BlockSpec((tile, H), lambda i: (i, 0)),
                   pl.BlockSpec((1, 2, H), lambda i: (i, 0, 0))),
        out_shape=(jax.ShapeDtypeStruct((n_pad, H), jnp.bfloat16),
                   jax.ShapeDtypeStruct((nt, 2, H), jnp.float32)),
        compiler_params=cparams,
        cost_estimate=pl.CostEstimate(
            flops=2 * n_pad * F * H, transcendentals=0,
            bytes_accessed=2 * (n_pad * F + F * H + n_pad * H) + 8 * nt * H),
    )(x_bf, w_enc)

    scale1, shift1 = _fold_bn(stats1, params["gamma1"], params["beta1"], N)

    # ---- pass 2: folded BN1 + projection matmul + BN2 stats ----------------
    z_pad, h0, stats2 = pl.pallas_call(
        functools.partial(_project_kernel, rows_total=N, tile_rows=tile,
                          needs_mask=needs_mask),
        grid=(nt,),
        in_specs=[pl.BlockSpec((tile, H), lambda i: (i, 0)),
                  pl.BlockSpec((H, H), lambda i: (0, 0)),           # resident weights
                  pl.BlockSpec((1, H), lambda i: (0, 0)),
                  pl.BlockSpec((1, H), lambda i: (0, 0))],
        out_specs=(pl.BlockSpec((tile, H), lambda i: (i, 0)),
                   pl.BlockSpec((tile, H), lambda i: (i, 0)),
                   pl.BlockSpec((1, 2, H), lambda i: (i, 0, 0))),
        out_shape=(jax.ShapeDtypeStruct((n_pad, H), jnp.float32),
                   jax.ShapeDtypeStruct((n_pad, H), jnp.bfloat16),
                   jax.ShapeDtypeStruct((nt, 2, H), jnp.float32)),
        compiler_params=cparams,
        cost_estimate=pl.CostEstimate(
            flops=2 * n_pad * H * H, transcendentals=0,
            bytes_accessed=2 * (n_pad * H + H * H + n_pad * H) + 4 * n_pad * H),
    )(z0, w_proj, scale1, shift1)

    # Dropout rescale 1/(1-p) folded straight into the BN2 scale/shift.
    scale2, shift2 = _fold_bn(stats2, params["gamma2"], params["beta2"], N,
                              post_scale=1.0 / (1.0 - DROPOUT_P))

    # ---- pass 3: folded BN2 + PReLU + dropout ------------------------------
    p_pad = pl.pallas_call(
        functools.partial(_head_kernel, tile_rows=tile, hidden=H,
                          keep_threshold=int(DROPOUT_P * (1 << 24))),
        grid=(nt,),
        in_specs=[pl.BlockSpec(memory_space=pltpu.MemorySpace.SMEM),   # seed
                  pl.BlockSpec(memory_space=pltpu.MemorySpace.SMEM),   # PReLU alpha
                  pl.BlockSpec((tile, H), lambda i: (i, 0)),
                  pl.BlockSpec((1, H), lambda i: (0, 0)),
                  pl.BlockSpec((1, H), lambda i: (0, 0))],
        out_specs=pl.BlockSpec((tile, H), lambda i: (i, 0)),
        out_shape=jax.ShapeDtypeStruct((n_pad, H), jnp.float32),
        compiler_params=cparams,
        cost_estimate=pl.CostEstimate(
            flops=6 * n_pad * H, transcendentals=0,
            bytes_accessed=2 * n_pad * H + 4 * n_pad * H + 8 * H),
    )(seed, params["alpha"], h0, scale2, shift2)

    if needs_mask:
        return z_pad[:N], p_pad[:N]
    return z_pad, p_pad


# ---------------------------------------------------------------------------
# parameters + pure-JAX f32 reference (keeps the biases the kernels drop)
# ---------------------------------------------------------------------------
def init_params(key, in_dim, hidden_dim):
    k = jax.random.split(key, 8)
    s_enc = in_dim ** -0.5
    s_proj = hidden_dim ** -0.5
    return {
        # encoder Linear, stored [in, out]
        "w_enc": jax.random.uniform(k[0], (in_dim, hidden_dim), jnp.float32, -s_enc, s_enc),
        "b_enc": jax.random.uniform(k[1], (1, hidden_dim), jnp.float32, -s_enc, s_enc),
        # BatchNorm1d #1 (non-trivial affine params to exercise the fold)
        "gamma1": 1.0 + 0.1 * jax.random.normal(k[2], (1, hidden_dim), jnp.float32),
        "beta1": 0.1 * jax.random.normal(k[3], (1, hidden_dim), jnp.float32),
        # projection Linear, stored [in, out]
        "w_proj": jax.random.uniform(k[4], (hidden_dim, hidden_dim), jnp.float32, -s_proj, s_proj),
        "b_proj": jax.random.uniform(k[5], (1, hidden_dim), jnp.float32, -s_proj, s_proj),
        # BatchNorm1d #2
        "gamma2": 1.0 + 0.1 * jax.random.normal(k[6], (1, hidden_dim), jnp.float32),
        "beta2": 0.1 * jax.random.normal(k[7], (1, hidden_dim), jnp.float32),
        # PReLU (single shared alpha)
        "alpha": jnp.array([PRELU_ALPHA], jnp.float32),
    }


def reference_no_dropout(x, params):
    """Pure-JAX f32 reference for everything up to (but excluding) dropout."""
    z0 = x @ params["w_enc"] + params["b_enc"]
    m1 = z0.mean(axis=0, keepdims=True)
    v1 = ((z0 - m1) ** 2).mean(axis=0, keepdims=True)
    z = (z0 - m1) / jnp.sqrt(v1 + EPS) * params["gamma1"] + params["beta1"]
    h = z @ params["w_proj"] + params["b_proj"]
    m2 = h.mean(axis=0, keepdims=True)
    v2 = ((h - m2) ** 2).mean(axis=0, keepdims=True)
    h = (h - m2) / jnp.sqrt(v2 + EPS) * params["gamma2"] + params["beta2"]
    h = jnp.where(h > 0, h, params["alpha"] * h)
    return z, h


if __name__ == "__main__":
    key = jax.random.PRNGKey(0)
    k_x, k_p = jax.random.split(key)

    # small but lane-dense: N nodes, F node features, H hidden (multiples of 128)
    N, F, H = 256, 128, 256
    x = jax.random.normal(k_x, (N, F), jnp.float32)
    params = init_params(k_p, F, H)
    seed = jnp.array([1234], jnp.int32)

    z, p = bgrl_forward(x, params, seed, tile_rows=128)   # 2 grid steps
    jax.block_until_ready((z, p))
    assert z.shape == (N, H) and p.shape == (N, H)

    # deterministic path vs pure-JAX f32 reference
    # (tolerances account for bf16 MXU operands and bf16 z0/h0 intermediates)
    z_ref, h_ref = reference_no_dropout(x, params)
    assert jnp.allclose(z, z_ref, atol=1e-1, rtol=5e-2), \
        float(jnp.max(jnp.abs(z - z_ref)))

    # dropout either zeroes an element or scales it by 1/(1-p)
    target = h_ref / (1.0 - DROPOUT_P)
    kept_ok = jnp.abs(p - target) <= (1e-1 + 5e-2 * jnp.abs(target))
    dropped = p == 0.0
    assert bool(jnp.all(kept_ok | dropped))
    drop_frac = float(jnp.mean(dropped.astype(jnp.float32)))
    assert 0.1 < drop_frac < 0.3, drop_frac

    print("KERNEL_OK")
</pallas_src>

<mosaic_0001>
module attributes {stable_mosaic.version = 11 : i64} {
  func.func @_encoder_kernel(%arg0: i32, %arg1: memref<128x128xbf16, #tpu.memory_space<vmem>>, %arg2: memref<128x256xbf16, #tpu.memory_space<vmem>>, %arg3: memref<128x256xbf16, #tpu.memory_space<vmem>>, %arg4: memref<1x2x256xf32, #tpu.memory_space<vmem>>) attributes {dimension_semantics = [#tpu.dimension_semantics<parallel>], iteration_bounds = array<i64: 2>, scalar_prefetch = 0 : i64, scratch_operands = 0 : i64, tpu.core_type = #tpu.core_type<tc>, window_params = [{transform_indices = @transform_0, window_bounds = array<i64: 128, 128>}, {pipeline_mode = #tpu.pipeline_mode<synchronous>, transform_indices = @transform_1, window_bounds = array<i64: 128, 256>}, {transform_indices = @transform_2, window_bounds = array<i64: 128, 256>}, {transform_indices = @transform_3, window_bounds = array<i64: 1, 2, 256>}]} {
    %c0 = arith.constant 0 : index
    %c0_0 = arith.constant 0 : index
    %0 = vector.load %arg1[%c0, %c0_0] : memref<128x128xbf16, #tpu.memory_space<vmem>>, vector<128x128xbf16>
    %c0_1 = arith.constant 0 : index
    %c0_2 = arith.constant 0 : index
    %1 = vector.load %arg2[%c0_1, %c0_2] : memref<128x256xbf16, #tpu.memory_space<vmem>>, vector<128x256xbf16>
    %cst = arith.constant dense<0.000000e+00> : vector<128x256xf32>
    %2 = tpu.matmul %0, %1, %cst {dimension_numbers = #tpu.dot_dimension_numbers<[1], [0], [0], [1], [0, 0, 1, 1], [], []>} : vector<128x128xbf16>, vector<128x256xbf16>, vector<128x256xf32> -> vector<128x256xf32>
    %cst_3 = arith.constant dense<0.000000e+00> : vector<256xf32>
    %3 = vector.multi_reduction <add>, %2, %cst_3 [0] : vector<128x256xf32> to vector<256xf32>
    %4 = vector.shape_cast %3 : vector<256xf32> to vector<1x256xf32>
    %5 = arith.mulf %2, %2 : vector<128x256xf32>
    %cst_4 = arith.constant dense<0.000000e+00> : vector<256xf32>
    %6 = vector.multi_reduction <add>, %5, %cst_4 [0] : vector<128x256xf32> to vector<256xf32>
    %7 = vector.shape_cast %6 : vector<256xf32> to vector<1x256xf32>
    %8 = tpu.concatenate %4, %7 in 0 : vector<1x256xf32>, vector<1x256xf32> -> vector<2x256xf32>
    %9 = vector.shape_cast %8 : vector<2x256xf32> to vector<1x2x256xf32>
    %c0_5 = arith.constant 0 : index
    %c0_6 = arith.constant 0 : index
    %c0_7 = arith.constant 0 : index
    %10 = vector.load %arg4[%c0_5, %c0_6, %c0_7] : memref<1x2x256xf32, #tpu.memory_space<vmem>>, vector<1x2x256xf32>
    tpu.vector_store %arg4[%c0_5, %c0_6, %c0_7], %9 {strides = array<i32>} : memref<1x2x256xf32, #tpu.memory_space<vmem>>, vector<1x2x256xf32>,
    %11 = arith.truncf %2 : vector<128x256xf32> to vector<128x256xbf16>
    %c0_8 = arith.constant 0 : index
    %c0_9 = arith.constant 0 : index
    %12 = vector.load %arg3[%c0_8, %c0_9] : memref<128x256xbf16, #tpu.memory_space<vmem>>, vector<128x256xbf16>
    tpu.vector_store %arg3[%c0_8, %c0_9], %11 {strides = array<i32>} : memref<128x256xbf16, #tpu.memory_space<vmem>>, vector<128x256xbf16>,
    return
  }
  func.func @transform_0(%arg0: i32) -> (i32, i32) {
    %c0_i32 = arith.constant 0 : i32
    %c0_i32_0 = arith.constant 0 : i32
    return %arg0, %c0_i32 : i32, i32
  }
  func.func @transform_1(%arg0: i32) -> (i32, i32) {
    %c0_i32 = arith.constant 0 : i32
    %c0_i32_0 = arith.constant 0 : i32
    %c0_i32_1 = arith.constant 0 : i32
    return %c0_i32, %c0_i32_0 : i32, i32
  }
  func.func @transform_2(%arg0: i32) -> (i32, i32) {
    %c0_i32 = arith.constant 0 : i32
    %c0_i32_0 = arith.constant 0 : i32
    return %arg0, %c0_i32 : i32, i32
  }
  func.func @transform_3(%arg0: i32) -> (i32, i32, i32) {
    %c0_i32 = arith.constant 0 : i32
    %c0_i32_0 = arith.constant 0 : i32
    %c0_i32_1 = arith.constant 0 : i32
    return %arg0, %c0_i32, %c0_i32_0 : i32, i32, i32
  }
}

</mosaic_0001>

<llo_original>
// kernel: tpu_custom_call.1
$region0: #{tpu_custom_call.1}
  #allocation0 [shape = 'u32[]', space=smem, size = 0x4, offset = 0x4, fixed_abs, tag = 'smem constant byte address 0x4 - core index']
  #allocation1 [shape = 'u32[144,128]{1,0:T(1,128)}', space=vmem, size = 0x12000, scoped, tag = 'internal scratch']
  %s0 = inlined_call_operand.hbm [shape: bf16[256,128], index: 0, kind: input, shape index: {}]
  %s1 = inlined_call_operand.hbm [shape: bf16[128,256], index: 1, kind: input, shape index: {}]
  %s2 = inlined_call_operand.hbm [shape: bf16[256,256], index: 2, kind: output, shape index: {0}]
  %s3 = inlined_call_operand.hbm [shape: f32[2,2,256], index: 3, kind: output, shape index: {1}]
  %4 = xla_tuple %s2, %s3
  %s5 = sld [smem:[#allocation0]]
  $region57: #{tpu_custom_call.1} parent=0
    _
  %s7 = ssub.s32 1, %s5
  %s8 = scalar_select 0, %s7, %s5
  $region1: #{tpu_custom_call.1} parent=0
    #allocation2 [shape = 'u8[65536]{0}', space=vmem, size = 0x10000, scoped, tag = 'input window, operand 0']
    #allocation3 [shape = 's32[2]{0}', space=sflag, size = 0x8, scoped, tag = 'scoped memory for tpu_custom_call.1']
    #allocation4 [shape = 's32[2]{0}', space=sflag, size = 0x8, scoped, tag = 'scoped memory for tpu_custom_call.1']
    #allocation5 [shape = 'u8[65536]{0}', space=vmem, size = 0x10000, scoped, tag = 'input window, operand 1, single buffered']
    #allocation6 [shape = 's32[1]{0}', space=sflag, size = 0x4, scoped, tag = 'scoped memory for tpu_custom_call.1']
    #allocation7 [shape = 'u8[131072]{0}', space=vmem, size = 0x20000, scoped, tag = 'output window, operand 0']
    #allocation8 [shape = 'u8[4096]{0}', space=vmem, size = 0x1000, scoped, tag = 'output window, operand 1']
    #allocation9 [shape = 's32[2]{0}', space=sflag, size = 0x8, scoped, tag = 'scoped memory for tpu_custom_call.1']
    %9 = vsyncpa [#allocation3], 0
    %s10 = scalar_lea.sflag [#allocation3], 1
    %11 = vsyncpa %s10, 0
    %12 = vsyncpa [#allocation6], 0
    %13 = vsyncpa [#allocation4], 0
    %s14 = scalar_lea.sflag [#allocation4], 1
    %15 = vsyncpa %s14, 0
    %16 = vsyncpa [#allocation9], 0
    %s17 = scalar_lea.sflag [#allocation9], 1
    %18 = vsyncpa %s17, 0
    loop: start=0, step=1, limit=4
    $region2: #{tpu_custom_call.1} parent=1 // loop_pre_header
      _
    $region3: #{tpu_custom_call.1} parent=1 // loop_header
      %s20 = sphi 0, %s24
      %p21 = scmp.ge.s32.totalorder %s20, 4
      %s30 = sphi 0, %s32
      %s33 = sphi 0, %s30
      %s34 = sphi 0, %s33
      %s50 = sphi 0, %s34
      %s54 = sphi 0, %s54
      %s56 = sphi 0, %s54
      %s57 = sphi 0, %s56
      %s71 = sphi 0, %s57
      %s77 = sphi 0, %s79
      %s80 = sphi 0, %s77
      %s81 = sphi 0, %s80
      %s97 = sphi 0, %s81
      %s103 = sphi 0, %s105
      %s106 = sphi 0, %s103
      %s107 = sphi 0, %s106
      %s123 = sphi 0, %s107
    $region4: #{tpu_custom_call.1} parent=1 // loop_header_branch
      %23 = sbr.rel (%p21) target = $region8
    $region5: #{tpu_custom_call.1} parent=1 // loop_body
      %s25 = ssub.s32 %s20, 1
      %s26 = ssub.s32 %s20, 2
      %s27 = sadd.s32 %s20, 1
      %s28 = ssub.s32 %s20, %s27
      %p29 = scmp.eq.s32.totalorder %s28, 0
      %s31 = sadd.s32 %s30, 1
      %s32 = scalar_select %p29, %s30, %s31
      %p35 = pneg %p29
      %p36 = scmp.eq.s32.totalorder %s20, 1
      %p37 = por %p35, %p36
      %p38 = scmp.ne.s32.totalorder %s30, %s33
      %p39 = scmp.eq.s32.totalorder %s20, 0
      %p40 = por %p38, %p39
      %p41 = scmp.ne.s32.totalorder %s30, %s33
      %p42 = scmp.eq.s32.totalorder %s25, 1
      %p43 = por %p41, %p42
      %p44 = scmp.ne.s32.totalorder %s33, %s34
      %p45 = scmp.eq.s32.totalorder %s25, 0
      %p46 = por %p44, %p45
      %p47 = scmp.ne.s32.totalorder %s33, %s34
      %p48 = scmp.eq.s32.totalorder %s26, 1
      %p49 = por %p47, %p48
      %p51 = scmp.ne.s32.totalorder %s34, %s50
      %p52 = scmp.eq.s32.totalorder %s26, 0
      %p53 = por %p51, %p52
      %s55 = sadd.s32 %s54, 1
      %p58 = scmp.eq.s32.totalorder %s20, 1
      %p59 = scmp.ne.s32.totalorder %s54, %s56
      %p60 = scmp.eq.s32.totalorder %s20, 0
      %p61 = por %p59, %p60
      %p62 = scmp.ne.s32.totalorder %s54, %s56
      %p63 = scmp.eq.s32.totalorder %s25, 1
      %p64 = por %p62, %p63
      %p65 = scmp.ne.s32.totalorder %s56, %s57
      %p66 = scmp.eq.s32.totalorder %s25, 0
      %p67 = por %p65, %p66
      %p68 = scmp.ne.s32.totalorder %s56, %s57
      %p69 = scmp.eq.s32.totalorder %s26, 1
      %p70 = por %p68, %p69
      %p72 = scmp.ne.s32.totalorder %s57, %s71
      %p73 = scmp.eq.s32.totalorder %s26, 0
      %p74 = por %p72, %p73
      %s75 = ssub.s32 %s20, %s27
      %p76 = scmp.eq.s32.totalorder %s75, 0
      %s78 = sadd.s32 %s77, 1
      %s79 = scalar_select %p76, %s77, %s78
      %p82 = pneg %p76
      %p83 = scmp.eq.s32.totalorder %s20, 1
      %p84 = por %p82, %p83
      %p85 = scmp.ne.s32.totalorder %s77, %s80
      %p86 = scmp.eq.s32.totalorder %s20, 0
      %p87 = por %p85, %p86
      %p88 = scmp.ne.s32.totalorder %s77, %s80
      %p89 = scmp.eq.s32.totalorder %s25, 1
      %p90 = por %p88, %p89
      %p91 = scmp.ne.s32.totalorder %s80, %s81
      %p92 = scmp.eq.s32.totalorder %s25, 0
      %p93 = por %p91, %p92
      %p94 = scmp.ne.s32.totalorder %s80, %s81
      %p95 = scmp.eq.s32.totalorder %s26, 1
      %p96 = por %p94, %p95
      %p98 = scmp.ne.s32.totalorder %s81, %s97
      %p99 = scmp.eq.s32.totalorder %s26, 0
      %p100 = por %p98, %p99
      %s101 = ssub.s32 %s20, %s27
      %p102 = scmp.eq.s32.totalorder %s101, 0
      %s104 = sadd.s32 %s103, 1
      %s105 = scalar_select %p102, %s103, %s104
      %p108 = pneg %p102
      %p109 = scmp.eq.s32.totalorder %s20, 1
      %p110 = por %p108, %p109
      %p111 = scmp.ne.s32.totalorder %s103, %s106
      %p112 = scmp.eq.s32.totalorder %s20, 0
      %p113 = por %p111, %p112
      %p114 = scmp.ne.s32.totalorder %s103, %s106
      %p115 = scmp.eq.s32.totalorder %s25, 1
      %p116 = por %p114, %p115
      %p117 = scmp.ne.s32.totalorder %s106, %s107
      %p118 = scmp.eq.s32.totalorder %s25, 0
      %p119 = por %p117, %p118
      %p120 = scmp.ne.s32.totalorder %s106, %s107
      %p121 = scmp.eq.s32.totalorder %s26, 1
      %p122 = por %p120, %p121
      %p124 = scmp.ne.s32.totalorder %s107, %s123
      %p125 = scmp.eq.s32.totalorder %s26, 0
      %p126 = por %p124, %p125
      %p127 = scmp.le.s32.totalorder 1, %s20
      %p128 = scmp.lt.s32.totalorder %s20, 3
      %p129 = pnand %p127, %p128
      %p130 = pneg %p129
      // Predicated region
      $region9: #{tpu_custom_call.1} parent=5 // pred_check
        _
      $region10: #{tpu_custom_call.1} parent=5 // pred_check_branch
        %132 = sbr.rel (%p129) target = $region12
      $region11: #{tpu_custom_call.1} parent=5 // pred_region
        %s133 = ssub.s32 %s20, 1
        // Predicated region
        $region13: #{tpu_custom_call.1} parent=11 // pred_check
          %p134 = pneg %p67
        $region14: #{tpu_custom_call.1} parent=11 // pred_check_branch
          %136 = sbr.rel (%p134) target = $region16
        $region15: #{tpu_custom_call.1} parent=11 // pred_region
          %s138 = ssub.s32 2048, 2048
          %139 = vsyncadd [#allocation6], %s138
          %s140 = sshll.u32 [#allocation5], 4
          %s141 = int_to_ptr.vmem [resolvable:$true] %s140
          %146 = dma.hbm_to_vmem [thread:$0]  %s1, 2048, %s141, [#allocation6], 128, 128, 8
        $region16: #{tpu_custom_call.1} parent=11 // pred_fallthru
          _
      $region12: #{tpu_custom_call.1} parent=5 // pred_fallthru
        _
      %p147 = scmp.lt.s32.totalorder %s20, 2
      // Predicated region
      $region17: #{tpu_custom_call.1} parent=5 // pred_check
        %p148 = pneg %p147
      $region18: #{tpu_custom_call.1} parent=5 // pred_check_branch
        %150 = sbr.rel (%p148) target = $region20
      $region19: #{tpu_custom_call.1} parent=5 // pred_region
        // Predicated region
        $region21: #{tpu_custom_call.1} parent=19 // pred_check
          %p151 = pneg %p40
        $region22: #{tpu_custom_call.1} parent=19 // pred_check_branch
          %153 = sbr.rel (%p151) target = $region24
        $region23: #{tpu_custom_call.1} parent=19 // pred_region
          %s154 = sand.u32 %s30, 1
          %s155 = scalar_lea.sflag [#allocation3], %s154
          %s156 = sand.u32 %s30, 1
          %s157 = smul.addr %s156, 64
          %s158 = scalar_lea.vmem [#allocation2], %s157
          %s159 = smul.u32 16, %s20
          %s161 = ssub.s32 1024, 1024
          %162 = vsyncadd %s155, %s161
          %s163 = smul.addr %s159, 64
          %s164 = scalar_lea.hbm %s0, %s163
          %s165 = sshll.u32 %s158, 4
          %s166 = int_to_ptr.vmem [resolvable:$true] %s165
          %171 = dma.hbm_to_vmem [thread:$0]  %s164, 1024, %s166, %s155, 64, 64, 4
        $region24: #{tpu_custom_call.1} parent=19 // pred_fallthru
          _
      $region20: #{tpu_custom_call.1} parent=5 // pred_fallthru
        _
      %p172 = scmp.le.s32.totalorder 1, %s20
      %p173 = scmp.lt.s32.totalorder %s20, 3
      %p174 = pnand %p172, %p173
      %p175 = pneg %p174
      // Predicated region
      $region25: #{tpu_custom_call.1} parent=5 // pred_check
        _
      $region26: #{tpu_custom_call.1} parent=5 // pred_check_branch
        %177 = sbr.rel (%p174) target = $region28
      $region27: #{tpu_custom_call.1} parent=5 // pred_region
        %s178 = ssub.s32 %s20, 1
        %s179 = sand.u32 %s33, 1
        %s180 = scalar_lea.sflag [#allocation3], %s179
        %s181 = sand.u32 %s33, 1
        %s182 = smul.addr %s181, 64
        %s183 = scalar_lea.vmem [#allocation2], %s182
        // Predicated region
        $region29: #{tpu_custom_call.1} parent=27 // pred_check
          %p184 = pneg %p46
        $region30: #{tpu_custom_call.1} parent=27 // pred_check_branch
          %186 = sbr.rel (%p184) target = $region32
        $region31: #{tpu_custom_call.1} parent=27 // pred_region
          %187 = dma.done %s180, 1024
        $region32: #{tpu_custom_call.1} parent=27 // pred_fallthru
          _
        // Predicated region
        $region33: #{tpu_custom_call.1} parent=27 // pred_check
          %p188 = pneg %p67
        $region34: #{tpu_custom_call.1} parent=27 // pred_check_branch
          %190 = sbr.rel (%p188) target = $region36
        $region35: #{tpu_custom_call.1} parent=27 // pred_region
          %191 = dma.done [#allocation6], 2048
        $region36: #{tpu_custom_call.1} parent=27 // pred_fallthru
          _
        %s192 = sand.u32 %s33, 1
        %s193 = scalar_lea.sflag [#allocation3], %s192
        %s194 = sand.u32 %s33, 1
        %s195 = smul.addr %s194, 64
        %s196 = scalar_lea.vmem [#allocation2], %s195
        %p197 = pneg %p46
        %p198 = pneg %p43
        %p199 = pneg %p67
        %p200 = pneg %p64
        %p201 = pneg %p93
        %p202 = pneg %p90
        %s203 = sand.u32 %s80, 1
        %s204 = scalar_lea.sflag [#allocation4], %s203
        %s205 = sand.u32 %s80, 1
        %s206 = smul.addr %s205, 128
        %s207 = scalar_lea.vmem [#allocation7], %s206
        %p208 = pneg %p119
        %p209 = pneg %p116
        %s210 = sand.u32 %s106, 1
        %s211 = scalar_lea.sflag [#allocation9], %s210
        %s212 = sand.u32 %s106, 1
        %s213 = smul.addr %s212, 4
        %s214 = scalar_lea.vmem [#allocation8], %s213
        %s215 = smul.u32 16, %s25
        %s216 = smul.u32 16, %s25
        %v218 = vld [vmem:[%s183] sm:$0xf]
        %v219 = vld [vmem:[%s183 + $0x4] sm:$0xf]
        %v220 = vld [vmem:[%s183 + $0x8] sm:$0xf]
        %v221 = vld [vmem:[%s183 + $0xc] sm:$0xf]
        %v222 = vld [vmem:[%s183 + $0x10] sm:$0xf]
        %v223 = vld [vmem:[%s183 + $0x14] sm:$0xf]
        %v224 = vld [vmem:[%s183 + $0x18] sm:$0xf]
        %v225 = vld [vmem:[%s183 + $0x1c] sm:$0xf]
        %v226 = vld [vmem:[%s183 + $0x20] sm:$0xf]
        %v227 = vld [vmem:[%s183 + $0x24] sm:$0xf]
        %v228 = vld [vmem:[%s183 + $0x28] sm:$0xf]
        %v229 = vld [vmem:[%s183 + $0x2c] sm:$0xf]
        %v230 = vld [vmem:[%s183 + $0x30] sm:$0xf]
        %v231 = vld [vmem:[%s183 + $0x34] sm:$0xf]
        %v232 = vld [vmem:[%s183 + $0x38] sm:$0xf]
        %v233 = vld [vmem:[%s183 + $0x3c] sm:$0xf]
        %v234 = vld [vmem:[#allocation5] sm:$0xff]
        %v235 = vld [vmem:[#allocation5 + $0x8] sm:$0xff]
        %v236 = vld [vmem:[#allocation5 + $0x10] sm:$0xff]
        %v237 = vld [vmem:[#allocation5 + $0x18] sm:$0xff]
        %v238 = vld [vmem:[#allocation5 + $0x20] sm:$0xff]
        %v239 = vld [vmem:[#allocation5 + $0x28] sm:$0xff]
        %v240 = vld [vmem:[#allocation5 + $0x30] sm:$0xff]
        %v241 = vld [vmem:[#allocation5 + $0x38] sm:$0xff]
        %v242 = vld [vmem:[#allocation5 + $0x40] sm:$0xff]
        %v243 = vld [vmem:[#allocation5 + $0x48] sm:$0xff]
        %v244 = vld [vmem:[#allocation5 + $0x50] sm:$0xff]
        %v245 = vld [vmem:[#allocation5 + $0x58] sm:$0xff]
        %v246 = vld [vmem:[#allocation5 + $0x60] sm:$0xff]
        %v247 = vld [vmem:[#allocation5 + $0x68] sm:$0xff]
        %v248 = vld [vmem:[#allocation5 + $0x70] sm:$0xff]
        %v249 = vld [vmem:[#allocation5 + $0x78] sm:$0xff]
        %v266 = vunpack.c.l.b16 %v218
        %v267 = vunpack.c.l.b16 %v219
        %v268 = vunpack.c.l.b16 %v220
        %v269 = vunpack.c.l.b16 %v221
        %v270 = vunpack.c.l.b16 %v222
        %v271 = vunpack.c.l.b16 %v223
        %v272 = vunpack.c.l.b16 %v224
        %v273 = vunpack.c.l.b16 %v225
        %v274 = vunpack.c.l.b16 %v226
        %v275 = vunpack.c.l.b16 %v227
        %v276 = vunpack.c.l.b16 %v228
        %v277 = vunpack.c.l.b16 %v229
        %v278 = vunpack.c.l.b16 %v230
        %v279 = vunpack.c.l.b16 %v231
        %v280 = vunpack.c.l.b16 %v232
        %v281 = vunpack.c.l.b16 %v233
        %v282 = vpack.c.b16 %v267, %v266
        %v283 = vpack.c.b16 %v269, %v268
        %v284 = vpack.c.b16 %v271, %v270
        %v285 = vpack.c.b16 %v273, %v272
        %v286 = vpack.c.b16 %v275, %v274
        %v287 = vpack.c.b16 %v277, %v276
        %v288 = vpack.c.b16 %v279, %v278
        %v289 = vpack.c.b16 %v281, %v280
        %v314 = vunpack.c.l.b16 %v234
        %v315 = vunpack.c.h.b16 %v234
        %v316 = vunpack.c.l.b16 %v235
        %v317 = vunpack.c.h.b16 %v235
        %v318 = vunpack.c.l.b16 %v236
        %v319 = vunpack.c.h.b16 %v236
        %v320 = vunpack.c.l.b16 %v237
        %v321 = vunpack.c.h.b16 %v237
        %v322 = vunpack.c.l.b16 %v238
        %v323 = vunpack.c.h.b16 %v238
        %v324 = vunpack.c.l.b16 %v239
        %v325 = vunpack.c.h.b16 %v239
        %v326 = vunpack.c.l.b16 %v240
        %v327 = vunpack.c.h.b16 %v240
        %v328 = vunpack.c.l.b16 %v241
        %v329 = vunpack.c.h.b16 %v241
        %v330 = vunpack.c.l.b16 %v242
        %v331 = vunpack.c.h.b16 %v242
        %v332 = vunpack.c.l.b16 %v243
        %v333 = vunpack.c.h.b16 %v243
        %v334 = vunpack.c.l.b16 %v244
        %v335 = vunpack.c.h.b16 %v244
        %v336 = vunpack.c.l.b16 %v245
        %v337 = vunpack.c.h.b16 %v245
        %v338 = vunpack.c.l.b16 %v246
        %v339 = vunpack.c.h.b16 %v246
        %v340 = vunpack.c.l.b16 %v247
        %v341 = vunpack.c.h.b16 %v247
        %v342 = vunpack.c.l.b16 %v248
        %v343 = vunpack.c.h.b16 %v248
        %v344 = vunpack.c.l.b16 %v249
        %v345 = vunpack.c.h.b16 %v249
        %v346 = vpack.c.b16 %v316, %v314
        %v347 = vpack.c.b16 %v317, %v315
        %v348 = vpack.c.b16 %v320, %v318
        %v349 = vpack.c.b16 %v321, %v319
        %v350 = vpack.c.b16 %v324, %v322
        %v351 = vpack.c.b16 %v325, %v323
        %v352 = vpack.c.b16 %v328, %v326
        %v353 = vpack.c.b16 %v329, %v327
        %v354 = vpack.c.b16 %v332, %v330
        %v355 = vpack.c.b16 %v333, %v331
        %v356 = vpack.c.b16 %v336, %v334
        %v357 = vpack.c.b16 %v337, %v335
        %v358 = vpack.c.b16 %v340, %v338
        %v359 = vpack.c.b16 %v341, %v339
        %v360 = vpack.c.b16 %v344, %v342
        %v361 = vpack.c.b16 %v345, %v343
        %378 = vmatprep.subr.bf16.mxu0 %v347
        %379 = vmatpush1.bf16.msra.mxu0 %v346
        %380 = vmatprep.subr.bf16.mxu0 %v349
        %381 = vmatpush1.bf16.msra.mxu0 %v348
        %382 = vmatprep.subr.bf16.mxu0 %v351
        %383 = vmatpush1.bf16.msra.mxu0 %v350
        %384 = vmatprep.subr.bf16.mxu0 %v353
        %385 = vmatpush1.bf16.msra.mxu0 %v352
        %386 = vmatprep.subr.bf16.mxu0 %v355
        %387 = vmatpush1.bf16.msra.mxu0 %v354
        %388 = vmatprep.subr.bf16.mxu0 %v357
        %389 = vmatpush1.bf16.msra.mxu0 %v356
        %390 = vmatprep.subr.bf16.mxu0 %v359
        %391 = vmatpush1.bf16.msra.mxu0 %v358
        %392 = vmatprep.subr.bf16.mxu0 %v361
        %393 = vmatpush1.bf16.msra.mxu0 %v360
        %394 = vmatprep.subr.bf16.mxu0 0
        %395 = vmatpush1.bf16.msra.mxu0 0
        %396 = vmatprep.subr.bf16.mxu0 0
        %397 = vmatpush1.bf16.msra.mxu0 0
        %398 = vmatprep.subr.bf16.mxu0 0
        %399 = vmatpush1.bf16.msra.mxu0 0
        %400 = vmatprep.subr.bf16.mxu0 0
        %401 = vmatpush1.bf16.msra.mxu0 0
        %402 = vmatprep.subr.bf16.mxu0 0
        %403 = vmatpush1.bf16.msra.mxu0 0
        %404 = vmatprep.subr.bf16.mxu0 0
        %405 = vmatpush1.bf16.msra.mxu0 0
        %406 = vmatprep.subr.bf16.mxu0 0
        %407 = vmatpush1.bf16.msra.mxu0 0
        %408 = vmatprep.subr.bf16.mxu0 0
        %409 = vmatpush1.bf16.msra.mxu0 0
        %410 = vmatprep.mubr.bf16.mxu0 0
        %411 = vmatmul.mubr.bf16.gmra.mrb[0].mxu0 %v282
        %v412 = vpop.f32.mrb[0].mxu0
        %v413 = vadd.f32 0.0, %v412
        %v414 = vpop.f32.mrb[0].mxu0
        %v415 = vadd.f32 0.0, %v414
        %v416 = vpop.f32.mrb[0].mxu0
        %v417 = vadd.f32 0.0, %v416
        %v418 = vpop.f32.mrb[0].mxu0
        %v419 = vadd.f32 0.0, %v418
        %420 = vmatprep.mubr.bf16.mxu0 0
        %421 = vmatmul.mubr.bf16.gmra.mrb[0].mxu0 %v283
        %v422 = vpop.f32.mrb[0].mxu0
        %v423 = vadd.f32 0.0, %v422
        %v424 = vpop.f32.mrb[0].mxu0
        %v425 = vadd.f32 0.0, %v424
        %v426 = vpop.f32.mrb[0].mxu0
        %v427 = vadd.f32 0.0, %v426
        %v428 = vpop.f32.mrb[0].mxu0
        %v429 = vadd.f32 0.0, %v428
        %430 = vmatprep.mubr.bf16.mxu0 0
        %431 = vmatmul.mubr.bf16.gmra.mrb[0].mxu0 %v284
        %v432 = vpop.f32.mrb[0].mxu0
        %v433 = vadd.f32 0.0, %v432
        %v434 = vpop.f32.mrb[0].mxu0
        %v435 = vadd.f32 0.0, %v434
        %v436 = vpop.f32.mrb[0].mxu0
        %v437 = vadd.f32 0.0, %v436
        %v438 = vpop.f32.mrb[0].mxu0
        %v439 = vadd.f32 0.0, %v438
        %440 = vmatprep.mubr.bf16.mxu0 0
        %441 = vmatmul.mubr.bf16.gmra.mrb[0].mxu0 %v285
        %v442 = vpop.f32.mrb[0].mxu0
        %v443 = vadd.f32 0.0, %v442
        %v444 = vpop.f32.mrb[0].mxu0
        %v445 = vadd.f32 0.0, %v444
        %v446 = vpop.f32.mrb[0].mxu0
        %v447 = vadd.f32 0.0, %v446
        %v448 = vpop.f32.mrb[0].mxu0
        %v449 = vadd.f32 0.0, %v448
        %450 = vmatprep.mubr.bf16.mxu0 0
        %451 = vmatmul.mubr.bf16.gmra.mrb[0].mxu0 %v286
        %v452 = vpop.f32.mrb[0].mxu0
        %v453 = vadd.f32 0.0, %v452
        %v454 = vpop.f32.mrb[0].mxu0
        %v455 = vadd.f32 0.0, %v454
        %v456 = vpop.f32.mrb[0].mxu0
        %v457 = vadd.f32 0.0, %v456
        %v458 = vpop.f32.mrb[0].mxu0
        %v459 = vadd.f32 0.0, %v458
        %460 = vmatprep.mubr.bf16.mxu0 0
        %461 = vmatmul.mubr.bf16.gmra.mrb[0].mxu0 %v287
        %v462 = vpop.f32.mrb[0].mxu0
        %v463 = vadd.f32 0.0, %v462
        %v464 = vpop.f32.mrb[0].mxu0
        %v465 = vadd.f32 0.0, %v464
        %v466 = vpop.f32.mrb[0].mxu0
        %v467 = vadd.f32 0.0, %v466
        %v468 = vpop.f32.mrb[0].mxu0
        %v469 = vadd.f32 0.0, %v468
        %470 = vmatprep.mubr.bf16.mxu0 0
        %471 = vmatmul.mubr.bf16.gmra.mrb[0].mxu0 %v288
        %v472 = vpop.f32.mrb[0].mxu0
        %v473 = vadd.f32 0.0, %v472
        %v474 = vpop.f32.mrb[0].mxu0
        %v475 = vadd.f32 0.0, %v474
        %v476 = vpop.f32.mrb[0].mxu0
        %v477 = vadd.f32 0.0, %v476
        %v478 = vpop.f32.mrb[0].mxu0
        %v479 = vadd.f32 0.0, %v478
        %480 = vmatprep.mubr.bf16.mxu0 0
        %481 = vmatmul.mubr.bf16.gmra.mrb[0].mxu0 %v289
        %v482 = vpop.f32.mrb[0].mxu0
        %v483 = vadd.f32 0.0, %v482
        %v484 = vpop.f32.mrb[0].mxu0
        %v485 = vadd.f32 0.0, %v484
        %v486 = vpop.f32.mrb[0].mxu0
        %v487 = vadd.f32 0.0, %v486
        %v488 = vpop.f32.mrb[0].mxu0
        %v489 = vadd.f32 0.0, %v488
        %490 = vdwg.mxu0
        %v491 = vadd.f32 %v413, %v417
        %v492 = vadd.f32 %v491, %v423
        %v493 = vadd.f32 %v492, %v427
        %v494 = vadd.f32 %v493, %v433
        %v495 = vadd.f32 %v494, %v437
        %v496 = vadd.f32 %v495, %v443
        %v497 = vadd.f32 %v496, %v447
        %v498 = vadd.f32 %v497, %v453
        %v499 = vadd.f32 %v498, %v457
        %v500 = vadd.f32 %v499, %v463
        %v501 = vadd.f32 %v500, %v467
        %v502 = vadd.f32 %v501, %v473
        %v503 = vadd.f32 %v502, %v477
        %v504 = vadd.f32 %v503, %v483
        %v505 = vadd.f32 %v504, %v487
        %v506 = vrot.slane %v505, 4
        %v507 = vadd.f32 %v505, %v506
        %v508 = vrot.slane %v507, 2
        %v509 = vadd.f32 %v507, %v508
        %v510 = vrot.slane %v509, 1
        %v511 = vadd.f32 %v509, %v510
        %v512 = vadd.f32 %v415, %v419
        %v513 = vadd.f32 %v512, %v425
        %v514 = vadd.f32 %v513, %v429
        %v515 = vadd.f32 %v514, %v435
        %v516 = vadd.f32 %v515, %v439
        %v517 = vadd.f32 %v516, %v445
        %v518 = vadd.f32 %v517, %v449
        %v519 = vadd.f32 %v518, %v455
        %v520 = vadd.f32 %v519, %v459
        %v521 = vadd.f32 %v520, %v465
        %v522 = vadd.f32 %v521, %v469
        %v523 = vadd.f32 %v522, %v475
        %v524 = vadd.f32 %v523, %v479
        %v525 = vadd.f32 %v524, %v485
        %v526 = vadd.f32 %v525, %v489
        %v527 = vrot.slane %v526, 4
        %v528 = vadd.f32 %v526, %v527
        %v529 = vrot.slane %v528, 2
        %v530 = vadd.f32 %v528, %v529
        %v531 = vrot.slane %v530, 1
        %v532 = vadd.f32 %v530, %v531
        %v533 = vmul.f32 %v413, %v413
        %v534 = vmul.f32 %v415, %v415
        %v535 = vmul.f32 %v417, %v417
        %v536 = vmul.f32 %v419, %v419
        %v537 = vmul.f32 %v423, %v423
        %v538 = vmul.f32 %v425, %v425
        %v539 = vmul.f32 %v427, %v427
        %v540 = vmul.f32 %v429, %v429
        %v541 = vmul.f32 %v433, %v433
        %v542 = vmul.f32 %v435, %v435
        %v543 = vmul.f32 %v437, %v437
        %v544 = vmul.f32 %v439, %v439
        %v545 = vmul.f32 %v443, %v443
        %v546 = vmul.f32 %v445, %v445
        %v547 = vmul.f32 %v447, %v447
        %v548 = vmul.f32 %v449, %v449
        %v549 = vmul.f32 %v453, %v453
        %v550 = vmul.f32 %v455, %v455
        %v551 = vmul.f32 %v457, %v457
        %v552 = vmul.f32 %v459, %v459
        %v553 = vmul.f32 %v463, %v463
        %v554 = vmul.f32 %v465, %v465
        %v555 = vmul.f32 %v467, %v467
        %v556 = vmul.f32 %v469, %v469
        %v557 = vmul.f32 %v473, %v473
        %v558 = vmul.f32 %v475, %v475
        %v559 = vmul.f32 %v477, %v477
        %v560 = vmul.f32 %v479, %v479
        %v561 = vmul.f32 %v483, %v483
        %v562 = vmul.f32 %v485, %v485
        %v563 = vmul.f32 %v487, %v487
        %v564 = vmul.f32 %v489, %v489
        %v565 = vadd.f32 %v533, %v535
        %v566 = vadd.f32 %v565, %v537
        %v567 = vadd.f32 %v566, %v539
        %v568 = vadd.f32 %v567, %v541
        %v569 = vadd.f32 %v568, %v543
        %v570 = vadd.f32 %v569, %v545
        %v571 = vadd.f32 %v570, %v547
        %v572 = vadd.f32 %v571, %v549
        %v573 = vadd.f32 %v572, %v551
        %v574 = vadd.f32 %v573, %v553
        %v575 = vadd.f32 %v574, %v555
        %v576 = vadd.f32 %v575, %v557
        %v577 = vadd.f32 %v576, %v559
        %v578 = vadd.f32 %v577, %v561
        %v579 = vadd.f32 %v578, %v563
        %v580 = vrot.slane %v579, 4
        %v581 = vadd.f32 %v579, %v580
        %v582 = vrot.slane %v581, 2
        %v583 = vadd.f32 %v581, %v582
        %v584 = vrot.slane %v583, 1
        %v585 = vadd.f32 %v583, %v584
        %v586 = vadd.f32 %v534, %v536
        %v587 = vadd.f32 %v586, %v538
        %v588 = vadd.f32 %v587, %v540
        %v589 = vadd.f32 %v588, %v542
        %v590 = vadd.f32 %v589, %v544
        %v591 = vadd.f32 %v590, %v546
        %v592 = vadd.f32 %v591, %v548
        %v593 = vadd.f32 %v592, %v550
        %v594 = vadd.f32 %v593, %v552
        %v595 = vadd.f32 %v594, %v554
        %v596 = vadd.f32 %v595, %v556
        %v597 = vadd.f32 %v596, %v558
        %v598 = vadd.f32 %v597, %v560
        %v599 = vadd.f32 %v598, %v562
        %v600 = vadd.f32 %v599, %v564
        %v601 = vrot.slane %v600, 4
        %v602 = vadd.f32 %v600, %v601
        %v603 = vrot.slane %v602, 2
        %v604 = vadd.f32 %v602, %v603
        %v605 = vrot.slane %v604, 1
        %v606 = vadd.f32 %v604, %v605
        %vm607 = vcmask 1040384
        %v608 = vsel %vm607, %v511, %v585
        %v609 = vsel %vm607, %v532, %v606
        %v612 = vcombine.low %v608, %v609
        %v614 = vunpack.c.l.s4 1983009808
        %v615 = vunpack.c.0.s8 %v614
        %v616 = vlaneseq
        %v617 = vshrl.u32 %v616, 7
        %v618 = vsub.s32 %v615, %v617
        %v619 = vrot.slane %v612, %v618
        %621 = vst [vmem:[%s214] sm:$0xf] %v619
        %v622 = vpack.c.bf16 %v417, %v413
        %v623 = vpack.c.bf16 %v419, %v415
        %v624 = vpack.c.bf16 %v427, %v423
        %v625 = vpack.c.bf16 %v429, %v425
        %v626 = vpack.c.bf16 %v437, %v433
        %v627 = vpack.c.bf16 %v439, %v435
        %v628 = vpack.c.bf16 %v447, %v443
        %v629 = vpack.c.bf16 %v449, %v445
        %v630 = vpack.c.bf16 %v457, %v453
        %v631 = vpack.c.bf16 %v459, %v455
        %v632 = vpack.c.bf16 %v467, %v463
        %v633 = vpack.c.bf16 %v469, %v465
        %v634 = vpack.c.bf16 %v477, %v473
        %v635 = vpack.c.bf16 %v479, %v475
        %v636 = vpack.c.bf16 %v487, %v483
        %v637 = vpack.c.bf16 %v489, %v485
        %v654 = vunpack.c.l.b16 %v622
        %v655 = vunpack.c.l.b16 %v623
        %v656 = vunpack.c.h.b16 %v622
        %v657 = vunpack.c.h.b16 %v623
        %v658 = vunpack.c.l.b16 %v624
        %v659 = vunpack.c.l.b16 %v625
        %v660 = vunpack.c.h.b16 %v624
        %v661 = vunpack.c.h.b16 %v625
        %v662 = vunpack.c.l.b16 %v626
        %v663 = vunpack.c.l.b16 %v627
        %v664 = vunpack.c.h.b16 %v626
        %v665 = vunpack.c.h.b16 %v627
        %v666 = vunpack.c.l.b16 %v628
        %v667 = vunpack.c.l.b16 %v629
        %v668 = vunpack.c.h.b16 %v628
        %v669 = vunpack.c.h.b16 %v629
        %v670 = vunpack.c.l.b16 %v630
        %v671 = vunpack.c.l.b16 %v631
        %v672 = vunpack.c.h.b16 %v630
        %v673 = vunpack.c.h.b16 %v631
        %v674 = vunpack.c.l.b16 %v632
        %v675 = vunpack.c.l.b16 %v633
        %v676 = vunpack.c.h.b16 %v632
        %v677 = vunpack.c.h.b16 %v633
        %v678 = vunpack.c.l.b16 %v634
        %v679 = vunpack.c.l.b16 %v635
        %v680 = vunpack.c.h.b16 %v634
        %v681 = vunpack.c.h.b16 %v635
        %v682 = vunpack.c.l.b16 %v636
        %v683 = vunpack.c.l.b16 %v637
        %v684 = vunpack.c.h.b16 %v636
        %v685 = vunpack.c.h.b16 %v637
        %v686 = vpack.c.b16 %v655, %v654
        %v687 = vpack.c.b16 %v657, %v656
        %v688 = vpack.c.b16 %v659, %v658
        %v689 = vpack.c.b16 %v661, %v660
        %v690 = vpack.c.b16 %v663, %v662
        %v691 = vpack.c.b16 %v665, %v664
        %v692 = vpack.c.b16 %v667, %v666
        %v693 = vpack.c.b16 %v669, %v668
        %v694 = vpack.c.b16 %v671, %v670
        %v695 = vpack.c.b16 %v673, %v672
        %v696 = vpack.c.b16 %v675, %v674
        %v697 = vpack.c.b16 %v677, %v676
        %v698 = vpack.c.b16 %v679, %v678
        %v699 = vpack.c.b16 %v681, %v680
        %v700 = vpack.c.b16 %v683, %v682
        %v701 = vpack.c.b16 %v685, %v684
        %718 = vst [vmem:[%s207] sm:$0xff] %v686
        %719 = vst [vmem:[%s207 + $0x8] sm:$0xff] %v687
        %720 = vst [vmem:[%s207 + $0x10] sm:$0xff] %v688
        %721 = vst [vmem:[%s207 + $0x18] sm:$0xff] %v689
        %722 = vst [vmem:[%s207 + $0x20] sm:$0xff] %v690
        %723 = vst [vmem:[%s207 + $0x28] sm:$0xff] %v691
        %724 = vst [vmem:[%s207 + $0x30] sm:$0xff] %v692
        %725 = vst [vmem:[%s207 + $0x38] sm:$0xff] %v693
        %726 = vst [vmem:[%s207 + $0x40] sm:$0xff] %v694
        %727 = vst [vmem:[%s207 + $0x48] sm:$0xff] %v695
        %728 = vst [vmem:[%s207 + $0x50] sm:$0xff] %v696
        %729 = vst [vmem:[%s207 + $0x58] sm:$0xff] %v697
        %730 = vst [vmem:[%s207 + $0x60] sm:$0xff] %v698
        %731 = vst [vmem:[%s207 + $0x68] sm:$0xff] %v699
        %732 = vst [vmem:[%s207 + $0x70] sm:$0xff] %v700
        %733 = vst [vmem:[%s207 + $0x78] sm:$0xff] %v701
        %s734 = sand.u32 %s80, 1
        %s735 = scalar_lea.sflag [#allocation4], %s734
        %s736 = sand.u32 %s80, 1
        %s737 = smul.addr %s736, 128
        %s738 = scalar_lea.vmem [#allocation7], %s737
        %s739 = sand.u32 %s106, 1
        %s740 = scalar_lea.sflag [#allocation9], %s739
        %s741 = sand.u32 %s106, 1
        %s742 = smul.addr %s741, 4
        %s743 = scalar_lea.vmem [#allocation8], %s742
        // Predicated region
        $region37: #{tpu_custom_call.1} parent=27 // pred_check
          %p744 = pneg %p90
        $region38: #{tpu_custom_call.1} parent=27 // pred_check_branch
          %746 = sbr.rel (%p744) target = $region40
        $region39: #{tpu_custom_call.1} parent=27 // pred_region
          %s747 = smul.u32 16, %s25
          %s749 = ssub.s32 2048, 2048
          %750 = vsyncadd %s735, %s749
          %s751 = smul.addr %s747, 2
          %s752 = smul.addr %s751, 64
          %s753 = scalar_lea.hbm %s2, %s752
          %s754 = sshll.u32 %s738, 4
          %s755 = int_to_ptr.vmem [resolvable:$true] %s754
          %760 = dma.vmem_to_hbm [thread:$0]  %s755, 2048, %s753, %s735, 128, 128, 8
        $region40: #{tpu_custom_call.1} parent=27 // pred_fallthru
          _
        // Predicated region
        $region41: #{tpu_custom_call.1} parent=27 // pred_check
          %p761 = pneg %p116
        $region42: #{tpu_custom_call.1} parent=27 // pred_check_branch
          %763 = sbr.rel (%p761) target = $region44
        $region43: #{tpu_custom_call.1} parent=27 // pred_region
          %s765 = ssub.s32 64, 64
          %766 = vsyncadd %s740, %s765
          %s767 = smul.addr %s25, 2
          %s768 = smul.addr %s767, 32
          %s769 = scalar_lea.hbm %s3, %s768
          %s771 = sshll.u32 %s743, 4
          %s772 = int_to_ptr.vmem [resolvable:$true] %s771
          %774 = dma.vmem_to_hbm [thread:$0]  %s772, 64, %s769, %s740
        $region44: #{tpu_custom_call.1} parent=27 // pred_fallthru
          _
      $region28: #{tpu_custom_call.1} parent=5 // pred_fallthru
        _
      %p775 = scmp.le.s32.totalorder 2, %s20
      // Predicated region
      $region45: #{tpu_custom_call.1} parent=5 // pred_check
        %p776 = pneg %p775
      $region46: #{tpu_custom_call.1} parent=5 // pred_check_branch
        %778 = sbr.rel (%p776) target = $region48
      $region47: #{tpu_custom_call.1} parent=5 // pred_region
        %s779 = ssub.s32 %s20, 2
        // Predicated region
        $region49: #{tpu_custom_call.1} parent=47 // pred_check
          %p780 = pneg %p96
        $region50: #{tpu_custom_call.1} parent=47 // pred_check_branch
          %782 = sbr.rel (%p780) target = $region52
        $region51: #{tpu_custom_call.1} parent=47 // pred_region
          %s783 = sand.u32 %s81, 1
          %s784 = scalar_lea.sflag [#allocation4], %s783
          %s785 = sand.u32 %s81, 1
          %s786 = smul.addr %s785, 128
          %s787 = scalar_lea.vmem [#allocation7], %s786
          %788 = dma.done %s784, 2048
        $region52: #{tpu_custom_call.1} parent=47 // pred_fallthru
          _
        // Predicated region
        $region53: #{tpu_custom_call.1} parent=47 // pred_check
          %p789 = pneg %p122
        $region54: #{tpu_custom_call.1} parent=47 // pred_check_branch
          %791 = sbr.rel (%p789) target = $region56
        $region55: #{tpu_custom_call.1} parent=47 // pred_region
          %s792 = sand.u32 %s107, 1
          %s793 = scalar_lea.sflag [#allocation9], %s792
          %s794 = sand.u32 %s107, 1
          %s795 = smul.addr %s794, 4
          %s796 = scalar_lea.vmem [#allocation8], %s795
          %797 = dma.done %s793, 64
        $region56: #{tpu_custom_call.1} parent=47 // pred_fallthru
          _
      $region48: #{tpu_custom_call.1} parent=5 // pred_fallthru
        _
    $region6: #{tpu_custom_call.1} parent=1 // loop_footer
      %s24 = sadd.s32 1, %s20
    $region7: #{tpu_custom_call.1} parent=1 // loop_footer_branch
      %19 = sbr.rel target = $region3
    $region8: #{tpu_custom_call.1} parent=1 // loop_exit
      _
    %798 = vsyncpa [#allocation3], 1
    %s799 = scalar_lea.sflag [#allocation3], 1
    %800 = vsyncpa %s799, 1
    %801 = vsyncpa [#allocation6], 1
    %802 = vsyncpa [#allocation4], 1
    %s803 = scalar_lea.sflag [#allocation4], 1
    %804 = vsyncpa %s803, 1
    %805 = vsyncpa [#allocation9], 1
    %s806 = scalar_lea.sflag [#allocation9], 1
    %807 = vsyncpa %s806, 1

</llo_original>
